<compile_context>
chip_gen: v7x
topology: tpu7x:2x2x1
jax: 0.10.0
libtpu: 0.0.40
codegen_flags: <defaults>
</compile_context>

<pallas_src>
import functools

import jax
import jax.numpy as jnp
from jax.experimental import pallas as pl
from jax.experimental.pallas import tpu as pltpu


# ----------------------------------------------------------------------------
# Pallas kernel: one batch tile per grid step
# ----------------------------------------------------------------------------

def _source_compressor_kernel(x_ref, wk_ref, bk_ref, wv_ref, bv_ref, q_ref,
                              o_ref, *, scale):
    bt, n, dp = x_ref.shape
    kq = q_ref.shape[0]

    # Shared projections: one big (Bt*N, Dp) x (Dp, Dp) MXU matmul each.
    x2 = x_ref[...].reshape(bt * n, dp)
    keys = jnp.dot(x2, wk_ref[...], preferred_element_type=jnp.float32) + bk_ref[...]
    vals = jnp.dot(x2, wv_ref[...], preferred_element_type=jnp.float32) + bv_ref[...]
    keys = keys.reshape(bt, n, dp)
    vals = vals.reshape(bt, n, dp)

    # All K queries at once, batched over the batch tile.
    qb = jnp.broadcast_to(q_ref[...], (bt, kq, dp))                     # (Bt, K, Dp)
    s = jnp.einsum('bkd,bnd->bkn', qb, keys,
                   preferred_element_type=jnp.float32) * scale          # (Bt, K, N)

    # Softmax over keys (scale applied exactly once above).
    m = jnp.max(s, axis=-1, keepdims=True)
    e = jnp.exp(s - m)
    denom = jnp.sum(e, axis=-1, keepdims=True)
    w = e * pl.reciprocal(denom, approx=True)                           # EUP divide

    out = jnp.einsum('bkn,bnd->bkd', w, vals,
                     preferred_element_type=jnp.float32)                # (Bt, K, Dp)
    o_ref[...] = out.astype(o_ref.dtype)                                # single store


def _replicated_spec(a):
    nd = a.ndim
    return pl.BlockSpec(a.shape, lambda i, _nd=nd: (0,) * _nd)


# ----------------------------------------------------------------------------
# Wrapper: lane-dense padding + pallas_call plumbing
# ----------------------------------------------------------------------------

def source_compressor(x, params, *, context_dim, batch_tile=None):
    """x: [B, N, D] float32 -> [B, K, D] float32."""
    wk, bk, wv, bv, queries = params
    B, N, D = x.shape
    assert D == context_dim
    K = queries.shape[0]
    scale = context_dim ** (-0.5)

    # Pad the feature dim to a multiple of 128 (lane-dense, unmasked stores).
    # Zero-padded weight columns / bias / query lanes keep the math exact.
    dp = ((D + 127) // 128) * 128
    pad = dp - D
    x_p = jnp.pad(x, ((0, 0), (0, 0), (0, pad)))
    wk_p = jnp.pad(wk, ((0, pad), (0, pad)))
    wv_p = jnp.pad(wv, ((0, pad), (0, pad)))
    bk_p = jnp.pad(bk.reshape(1, D), ((0, 0), (0, pad)))
    bv_p = jnp.pad(bv.reshape(1, D), ((0, 0), (0, pad)))
    q_p = jnp.pad(queries, ((0, 0), (0, pad)))

    # Batch tile: several batch elements per grid step to fill MXU rows and
    # amortize the ~0.35 us/step pipeline overhead.
    bt = batch_tile if batch_tile is not None else min(B, 8)
    if B % bt != 0:
        bt = 1
    grid = (B // bt,)

    kernel = functools.partial(_source_compressor_kernel, scale=scale)
    weights = (wk_p, bk_p, wv_p, bv_p, q_p)
    in_specs = [pl.BlockSpec((bt, N, dp), lambda i: (i, 0, 0))]
    in_specs += [_replicated_spec(p) for p in weights]

    out_p = pl.pallas_call(
        kernel,
        out_shape=jax.ShapeDtypeStruct((B, K, dp), jnp.float32),
        grid=grid,
        in_specs=in_specs,
        out_specs=pl.BlockSpec((bt, K, dp), lambda i: (i, 0, 0)),
        compiler_params=pltpu.CompilerParams(
            dimension_semantics=("parallel",)),   # batch axis is independent
    )(x_p, *weights)

    return out_p[..., :D]   # drop pad lanes outside the kernel


# ----------------------------------------------------------------------------
# Pure-JAX reference (for correctness check)
# ----------------------------------------------------------------------------

def source_compressor_ref(x, wk, bk, wv, bv, queries, scale):
    keys = x @ wk + bk
    vals = x @ wv + bv
    s = jnp.einsum('kd,bnd->bkn', queries, keys) * scale
    w = jax.nn.softmax(s, axis=-1)
    return jnp.einsum('bkn,bnd->bkd', w, vals)


# ----------------------------------------------------------------------------
# Demo / smoke test
# ----------------------------------------------------------------------------

if __name__ == "__main__":
    B, N, D, K = 4, 16, 65, 4          # context_dim = 65 as in the reference
    scale = D ** (-0.5)

    key = jax.random.PRNGKey(0)
    kx, kw1, kb1, kw2, kb2, kq = jax.random.split(key, 6)

    x = jax.random.normal(kx, (B, N, D), jnp.float32)
    # key_layer: weight ~ N(0, scale) as in the reference init; value_layer +
    # biases use deterministic synthetic inits of similar magnitude.
    wk = jax.random.normal(kw1, (D, D), jnp.float32) * scale
    bk = jax.random.normal(kb1, (D,), jnp.float32) * 0.01
    wv = jax.random.normal(kw2, (D, D), jnp.float32) * scale
    bv = jax.random.normal(kb2, (D,), jnp.float32) * 0.01
    queries = jax.random.normal(kq, (K, D), jnp.float32) * scale

    out = source_compressor(x, (wk, bk, wv, bv, queries),
                            context_dim=D, batch_tile=2)
    out = jax.block_until_ready(out)

    ref = source_compressor_ref(x, wk, bk, wv, bv, queries, scale)
    err = float(jnp.max(jnp.abs(out - ref)))

    assert out.shape == (B, K, D)
    assert bool(jnp.all(jnp.isfinite(out)))
    assert err < 5e-2, f"max abs error vs reference: {err}"
    print("KERNEL_OK")
</pallas_src>

<mosaic_0001>
module attributes {stable_mosaic.version = 11 : i64} {
  func.func @_source_compressor_kernel(%arg0: i32, %arg1: memref<2x16x128xf32, #tpu.memory_space<vmem>>, %arg2: memref<128x128xf32, #tpu.memory_space<vmem>>, %arg3: memref<1x128xf32, #tpu.memory_space<vmem>>, %arg4: memref<128x128xf32, #tpu.memory_space<vmem>>, %arg5: memref<1x128xf32, #tpu.memory_space<vmem>>, %arg6: memref<4x128xf32, #tpu.memory_space<vmem>>, %arg7: memref<2x4x128xf32, #tpu.memory_space<vmem>>) attributes {dimension_semantics = [#tpu.dimension_semantics<parallel>], iteration_bounds = array<i64: 2>, scalar_prefetch = 0 : i64, scratch_operands = 0 : i64, tpu.core_type = #tpu.core_type<tc>, window_params = [{transform_indices = @transform_0, window_bounds = array<i64: 2, 16, 128>}, {pipeline_mode = #tpu.pipeline_mode<synchronous>, transform_indices = @transform_1, window_bounds = array<i64: 128, 128>}, {pipeline_mode = #tpu.pipeline_mode<synchronous>, transform_indices = @transform_2, window_bounds = array<i64: 1, 128>}, {pipeline_mode = #tpu.pipeline_mode<synchronous>, transform_indices = @transform_3, window_bounds = array<i64: 128, 128>}, {pipeline_mode = #tpu.pipeline_mode<synchronous>, transform_indices = @transform_4, window_bounds = array<i64: 1, 128>}, {pipeline_mode = #tpu.pipeline_mode<synchronous>, transform_indices = @transform_5, window_bounds = array<i64: 4, 128>}, {transform_indices = @transform_6, window_bounds = array<i64: 2, 4, 128>}]} {
    %c0 = arith.constant 0 : index
    %c0_0 = arith.constant 0 : index
    %c0_1 = arith.constant 0 : index
    %0 = vector.load %arg1[%c0, %c0_0, %c0_1] : memref<2x16x128xf32, #tpu.memory_space<vmem>>, vector<2x16x128xf32>
    %1 = vector.shape_cast %0 : vector<2x16x128xf32> to vector<32x128xf32>
    %c0_2 = arith.constant 0 : index
    %c0_3 = arith.constant 0 : index
    %2 = vector.load %arg2[%c0_2, %c0_3] : memref<128x128xf32, #tpu.memory_space<vmem>>, vector<128x128xf32>
    %cst = arith.constant dense<0.000000e+00> : vector<32x128xf32>
    %3 = tpu.matmul %1, %2, %cst {dimension_numbers = #tpu.dot_dimension_numbers<[1], [0], [0], [1], [0, 0, 1, 1], [], []>} : vector<32x128xf32>, vector<128x128xf32>, vector<32x128xf32> -> vector<32x128xf32>
    %c0_4 = arith.constant 0 : index
    %c0_5 = arith.constant 0 : index
    %4 = vector.load %arg3[%c0_4, %c0_5] : memref<1x128xf32, #tpu.memory_space<vmem>>, vector<1x128xf32>
    %5 = vector.broadcast %4 : vector<1x128xf32> to vector<32x128xf32>
    %6 = arith.addf %3, %5 : vector<32x128xf32>
    %c0_6 = arith.constant 0 : index
    %c0_7 = arith.constant 0 : index
    %7 = vector.load %arg4[%c0_6, %c0_7] : memref<128x128xf32, #tpu.memory_space<vmem>>, vector<128x128xf32>
    %cst_8 = arith.constant dense<0.000000e+00> : vector<32x128xf32>
    %8 = tpu.matmul %1, %7, %cst_8 {dimension_numbers = #tpu.dot_dimension_numbers<[1], [0], [0], [1], [0, 0, 1, 1], [], []>} : vector<32x128xf32>, vector<128x128xf32>, vector<32x128xf32> -> vector<32x128xf32>
    %c0_9 = arith.constant 0 : index
    %c0_10 = arith.constant 0 : index
    %9 = vector.load %arg5[%c0_9, %c0_10] : memref<1x128xf32, #tpu.memory_space<vmem>>, vector<1x128xf32>
    %10 = vector.broadcast %9 : vector<1x128xf32> to vector<32x128xf32>
    %11 = arith.addf %8, %10 : vector<32x128xf32>
    %12 = vector.shape_cast %6 : vector<32x128xf32> to vector<2x16x128xf32>
    %13 = vector.shape_cast %11 : vector<32x128xf32> to vector<2x16x128xf32>
    %c0_11 = arith.constant 0 : index
    %c0_12 = arith.constant 0 : index
    %14 = vector.load %arg6[%c0_11, %c0_12] : memref<4x128xf32, #tpu.memory_space<vmem>>, vector<4x128xf32>
    %15 = vector.shape_cast %14 : vector<4x128xf32> to vector<1x4x128xf32>
    %16 = vector.broadcast %15 : vector<1x4x128xf32> to vector<2x4x128xf32>
    "tpu.trace_start"() <{level = 10 : i32, message = "bkd,bnd->bkn"}> : () -> ()
    %cst_13 = arith.constant dense<0.000000e+00> : vector<2x4x16xf32>
    %17 = tpu.matmul %16, %12, %cst_13 {dimension_numbers = #tpu.dot_dimension_numbers<[2], [2], [1], [1], [0, 0, 0, 1, 1, 1], [0], [0]>} : vector<2x4x128xf32>, vector<2x16x128xf32>, vector<2x4x16xf32> -> vector<2x4x16xf32>
    "tpu.trace_stop"() : () -> ()
    %cst_14 = arith.constant 0.124034733 : f32
    %18 = vector.broadcast %cst_14 : f32 to vector<2x4x16xf32>
    %19 = arith.mulf %17, %18 : vector<2x4x16xf32>
    %cst_15 = arith.constant dense<0xFF800000> : vector<2x4xf32>
    %20 = vector.multi_reduction <maximumf>, %19, %cst_15 [2] : vector<2x4x16xf32> to vector<2x4xf32>
    %21 = vector.shape_cast %20 : vector<2x4xf32> to vector<2x4x1xf32>
    %22 = vector.broadcast %21 : vector<2x4x1xf32> to vector<2x4x16xf32>
    %23 = arith.subf %19, %22 : vector<2x4x16xf32>
    %24 = math.exp %23 : vector<2x4x16xf32>
    %cst_16 = arith.constant dense<0.000000e+00> : vector<2x4xf32>
    %25 = vector.multi_reduction <add>, %24, %cst_16 [2] : vector<2x4x16xf32> to vector<2x4xf32>
    %26 = vector.shape_cast %25 : vector<2x4xf32> to vector<2x4x1xf32>
    %27 = tpu.reciprocal %26 {approx = true} : vector<2x4x1xf32> -> vector<2x4x1xf32>
    %28 = vector.broadcast %27 : vector<2x4x1xf32> to vector<2x4x16xf32>
    %29 = arith.mulf %24, %28 : vector<2x4x16xf32>
    "tpu.trace_start"() <{level = 10 : i32, message = "bkn,bnd->bkd"}> : () -> ()
    %cst_17 = arith.constant dense<0.000000e+00> : vector<2x4x128xf32>
    %30 = tpu.matmul %29, %13, %cst_17 {dimension_numbers = #tpu.dot_dimension_numbers<[2], [1], [1], [2], [0, 0, 0, 1, 1, 2], [0], [0]>} : vector<2x4x16xf32>, vector<2x16x128xf32>, vector<2x4x128xf32> -> vector<2x4x128xf32>
    "tpu.trace_stop"() : () -> ()
    %c0_18 = arith.constant 0 : index
    %c0_19 = arith.constant 0 : index
    %c0_20 = arith.constant 0 : index
    %31 = vector.load %arg7[%c0_18, %c0_19, %c0_20] : memref<2x4x128xf32, #tpu.memory_space<vmem>>, vector<2x4x128xf32>
    tpu.vector_store %arg7[%c0_18, %c0_19, %c0_20], %30 {strides = array<i32>} : memref<2x4x128xf32, #tpu.memory_space<vmem>>, vector<2x4x128xf32>,
    return
  }
  func.func @transform_0(%arg0: i32) -> (i32, i32, i32) {
    %c0_i32 = arith.constant 0 : i32
    %c0_i32_0 = arith.constant 0 : i32
    %c0_i32_1 = arith.constant 0 : i32
    return %arg0, %c0_i32, %c0_i32_0 : i32, i32, i32
  }
  func.func @transform_1(%arg0: i32) -> (i32, i32) {
    %c0_i32 = arith.constant 0 : i32
    %c0_i32_0 = arith.constant 0 : i32
    %c0_i32_1 = arith.constant 0 : i32
    return %c0_i32, %c0_i32_0 : i32, i32
  }
  func.func @transform_2(%arg0: i32) -> (i32, i32) {
    %c0_i32 = arith.constant 0 : i32
    %c0_i32_0 = arith.constant 0 : i32
    %c0_i32_1 = arith.constant 0 : i32
    return %c0_i32, %c0_i32_0 : i32, i32
  }
  func.func @transform_3(%arg0: i32) -> (i32, i32) {
    %c0_i32 = arith.constant 0 : i32
    %c0_i32_0 = arith.constant 0 : i32
    %c0_i32_1 = arith.constant 0 : i32
    return %c0_i32, %c0_i32_0 : i32, i32
  }
  func.func @transform_4(%arg0: i32) -> (i32, i32) {
    %c0_i32 = arith.constant 0 : i32
    %c0_i32_0 = arith.constant 0 : i32
    %c0_i32_1 = arith.constant 0 : i32
    return %c0_i32, %c0_i32_0 : i32, i32
  }
  func.func @transform_5(%arg0: i32) -> (i32, i32) {
    %c0_i32 = arith.constant 0 : i32
    %c0_i32_0 = arith.constant 0 : i32
    %c0_i32_1 = arith.constant 0 : i32
    return %c0_i32, %c0_i32_0 : i32, i32
  }
  func.func @transform_6(%arg0: i32) -> (i32, i32, i32) {
    %c0_i32 = arith.constant 0 : i32
    %c0_i32_0 = arith.constant 0 : i32
    %c0_i32_1 = arith.constant 0 : i32
    return %arg0, %c0_i32, %c0_i32_0 : i32, i32, i32
  }
}

</mosaic_0001>

<llo_original>
// kernel: tpu_custom_call.1
$region0: #{tpu_custom_call.1}
  #allocation0 [shape = 'u32[]', space=smem, size = 0x4, offset = 0x4, fixed_abs, tag = 'smem constant byte address 0x4 - core index']
  #allocation1 [shape = 'u32[144,128]{1,0:T(1,128)}', space=vmem, size = 0x12000, scoped, tag = 'internal scratch']
  %s0 = inlined_call_operand.hbm [shape: f32[4,16,128], index: 0, kind: input, shape index: {}]
  %s1 = inlined_call_operand.hbm [shape: f32[128,128], index: 1, kind: input, shape index: {}]
  %s2 = inlined_call_operand.vmem [shape: f32[1,128], index: 2, kind: input, shape index: {}]
  %s3 = inlined_call_operand.hbm [shape: f32[128,128], index: 3, kind: input, shape index: {}]
  %s4 = inlined_call_operand.vmem [shape: f32[1,128], index: 4, kind: input, shape index: {}]
  %s5 = inlined_call_operand.vmem [shape: f32[4,128], index: 5, kind: input, shape index: {}]
  %s6 = inlined_call_operand.hbm [shape: f32[4,4,128], index: 6, kind: output, shape index: {}]
  %s7 = sld [smem:[#allocation0]]
  $region69: #{tpu_custom_call.1} parent=0
    _
  %s9 = ssub.s32 1, %s7
  %s10 = scalar_select 0, %s9, %s7
  $region1: #{tpu_custom_call.1} parent=0
    #allocation2 [shape = 'u8[32768]{0}', space=vmem, size = 0x8000, scoped, tag = 'input window, operand 0']
    #allocation3 [shape = 's32[2]{0}', space=sflag, size = 0x8, scoped, tag = 'scoped memory for tpu_custom_call.1']
    #allocation4 [shape = 's32[2]{0}', space=sflag, size = 0x8, scoped, tag = 'scoped memory for tpu_custom_call.1']
    #allocation5 [shape = 'u8[65536]{0}', space=vmem, size = 0x10000, scoped, tag = 'input window, operand 1, single buffered']
    #allocation6 [shape = 's32[1]{0}', space=sflag, size = 0x4, scoped, tag = 'scoped memory for tpu_custom_call.1']
    #allocation7 [shape = 'u8[65536]{0}', space=vmem, size = 0x10000, scoped, tag = 'input window, operand 3, single buffered']
    #allocation8 [shape = 'u8[8192]{0}', space=vmem, size = 0x2000, scoped, tag = 'output window, operand 0']
    %11 = vsyncpa [#allocation3], 0
    %s12 = scalar_lea.sflag [#allocation3], 1
    %13 = vsyncpa %s12, 0
    %14 = vsyncpa [#allocation6], 0
    %15 = vsyncpa [#allocation4], 0
    %s16 = scalar_lea.sflag [#allocation4], 1
    %17 = vsyncpa %s16, 0
    loop: start=0, step=1, limit=4
    $region2: #{tpu_custom_call.1} parent=1 // loop_pre_header
      _
    $region3: #{tpu_custom_call.1} parent=1 // loop_header
      %s19 = sphi 0, %s23
      %p20 = scmp.ge.s32.totalorder %s19, 4
      %s29 = sphi 0, %s31
      %s32 = sphi 0, %s29
      %s33 = sphi 0, %s32
      %s49 = sphi 0, %s33
      %s53 = sphi 0, %s53
      %s55 = sphi 0, %s53
      %s56 = sphi 0, %s55
      %s70 = sphi 0, %s56
      %s74 = sphi 0, %s74
      %s76 = sphi 0, %s74
      %s77 = sphi 0, %s76
      %s91 = sphi 0, %s77
      %s95 = sphi 0, %s95
      %s97 = sphi 0, %s95
      %s98 = sphi 0, %s97
      %s112 = sphi 0, %s98
      %s116 = sphi 0, %s116
      %s118 = sphi 0, %s116
      %s119 = sphi 0, %s118
      %s133 = sphi 0, %s119
      %s137 = sphi 0, %s137
      %s139 = sphi 0, %s137
      %s140 = sphi 0, %s139
      %s154 = sphi 0, %s140
      %s160 = sphi 0, %s162
      %s163 = sphi 0, %s160
      %s164 = sphi 0, %s163
      %s180 = sphi 0, %s164
    $region4: #{tpu_custom_call.1} parent=1 // loop_header_branch
      %22 = sbr.rel (%p20) target = $region8
    $region5: #{tpu_custom_call.1} parent=1 // loop_body
      %s24 = ssub.s32 %s19, 1
      %s25 = ssub.s32 %s19, 2
      %s26 = sadd.s32 %s19, 1
      %s27 = ssub.s32 %s19, %s26
      %p28 = scmp.eq.s32.totalorder %s27, 0
      %s30 = sadd.s32 %s29, 1
      %s31 = scalar_select %p28, %s29, %s30
      %p34 = pneg %p28
      %p35 = scmp.eq.s32.totalorder %s19, 1
      %p36 = por %p34, %p35
      %p37 = scmp.ne.s32.totalorder %s29, %s32
      %p38 = scmp.eq.s32.totalorder %s19, 0
      %p39 = por %p37, %p38
      %p40 = scmp.ne.s32.totalorder %s29, %s32
      %p41 = scmp.eq.s32.totalorder %s24, 1
      %p42 = por %p40, %p41
      %p43 = scmp.ne.s32.totalorder %s32, %s33
      %p44 = scmp.eq.s32.totalorder %s24, 0
      %p45 = por %p43, %p44
      %p46 = scmp.ne.s32.totalorder %s32, %s33
      %p47 = scmp.eq.s32.totalorder %s25, 1
      %p48 = por %p46, %p47
      %p50 = scmp.ne.s32.totalorder %s33, %s49
      %p51 = scmp.eq.s32.totalorder %s25, 0
      %p52 = por %p50, %p51
      %s54 = sadd.s32 %s53, 1
      %p57 = scmp.eq.s32.totalorder %s19, 1
      %p58 = scmp.ne.s32.totalorder %s53, %s55
      %p59 = scmp.eq.s32.totalorder %s19, 0
      %p60 = por %p58, %p59
      %p61 = scmp.ne.s32.totalorder %s53, %s55
      %p62 = scmp.eq.s32.totalorder %s24, 1
      %p63 = por %p61, %p62
      %p64 = scmp.ne.s32.totalorder %s55, %s56
      %p65 = scmp.eq.s32.totalorder %s24, 0
      %p66 = por %p64, %p65
      %p67 = scmp.ne.s32.totalorder %s55, %s56
      %p68 = scmp.eq.s32.totalorder %s25, 1
      %p69 = por %p67, %p68
      %p71 = scmp.ne.s32.totalorder %s56, %s70
      %p72 = scmp.eq.s32.totalorder %s25, 0
      %p73 = por %p71, %p72
      %s75 = sadd.s32 %s74, 1
      %p78 = scmp.eq.s32.totalorder %s19, 1
      %p79 = scmp.ne.s32.totalorder %s74, %s76
      %p80 = scmp.eq.s32.totalorder %s19, 0
      %p81 = por %p79, %p80
      %p82 = scmp.ne.s32.totalorder %s74, %s76
      %p83 = scmp.eq.s32.totalorder %s24, 1
      %p84 = por %p82, %p83
      %p85 = scmp.ne.s32.totalorder %s76, %s77
      %p86 = scmp.eq.s32.totalorder %s24, 0
      %p87 = por %p85, %p86
      %p88 = scmp.ne.s32.totalorder %s76, %s77
      %p89 = scmp.eq.s32.totalorder %s25, 1
      %p90 = por %p88, %p89
      %p92 = scmp.ne.s32.totalorder %s77, %s91
      %p93 = scmp.eq.s32.totalorder %s25, 0
      %p94 = por %p92, %p93
      %s96 = sadd.s32 %s95, 1
      %p99 = scmp.eq.s32.totalorder %s19, 1
      %p100 = scmp.ne.s32.totalorder %s95, %s97
      %p101 = scmp.eq.s32.totalorder %s19, 0
      %p102 = por %p100, %p101
      %p103 = scmp.ne.s32.totalorder %s95, %s97
      %p104 = scmp.eq.s32.totalorder %s24, 1
      %p105 = por %p103, %p104
      %p106 = scmp.ne.s32.totalorder %s97, %s98
      %p107 = scmp.eq.s32.totalorder %s24, 0
      %p108 = por %p106, %p107
      %p109 = scmp.ne.s32.totalorder %s97, %s98
      %p110 = scmp.eq.s32.totalorder %s25, 1
      %p111 = por %p109, %p110
      %p113 = scmp.ne.s32.totalorder %s98, %s112
      %p114 = scmp.eq.s32.totalorder %s25, 0
      %p115 = por %p113, %p114
      %s117 = sadd.s32 %s116, 1
      %p120 = scmp.eq.s32.totalorder %s19, 1
      %p121 = scmp.ne.s32.totalorder %s116, %s118
      %p122 = scmp.eq.s32.totalorder %s19, 0
      %p123 = por %p121, %p122
      %p124 = scmp.ne.s32.totalorder %s116, %s118
      %p125 = scmp.eq.s32.totalorder %s24, 1
      %p126 = por %p124, %p125
      %p127 = scmp.ne.s32.totalorder %s118, %s119
      %p128 = scmp.eq.s32.totalorder %s24, 0
      %p129 = por %p127, %p128
      %p130 = scmp.ne.s32.totalorder %s118, %s119
      %p131 = scmp.eq.s32.totalorder %s25, 1
      %p132 = por %p130, %p131
      %p134 = scmp.ne.s32.totalorder %s119, %s133
      %p135 = scmp.eq.s32.totalorder %s25, 0
      %p136 = por %p134, %p135
      %s138 = sadd.s32 %s137, 1
      %p141 = scmp.eq.s32.totalorder %s19, 1
      %p142 = scmp.ne.s32.totalorder %s137, %s139
      %p143 = scmp.eq.s32.totalorder %s19, 0
      %p144 = por %p142, %p143
      %p145 = scmp.ne.s32.totalorder %s137, %s139
      %p146 = scmp.eq.s32.totalorder %s24, 1
      %p147 = por %p145, %p146
      %p148 = scmp.ne.s32.totalorder %s139, %s140
      %p149 = scmp.eq.s32.totalorder %s24, 0
      %p150 = por %p148, %p149
      %p151 = scmp.ne.s32.totalorder %s139, %s140
      %p152 = scmp.eq.s32.totalorder %s25, 1
      %p153 = por %p151, %p152
      %p155 = scmp.ne.s32.totalorder %s140, %s154
      %p156 = scmp.eq.s32.totalorder %s25, 0
      %p157 = por %p155, %p156
      %s158 = ssub.s32 %s19, %s26
      %p159 = scmp.eq.s32.totalorder %s158, 0
      %s161 = sadd.s32 %s160, 1
      %s162 = scalar_select %p159, %s160, %s161
      %p165 = pneg %p159
      %p166 = scmp.eq.s32.totalorder %s19, 1
      %p167 = por %p165, %p166
      %p168 = scmp.ne.s32.totalorder %s160, %s163
      %p169 = scmp.eq.s32.totalorder %s19, 0
      %p170 = por %p168, %p169
      %p171 = scmp.ne.s32.totalorder %s160, %s163
      %p172 = scmp.eq.s32.totalorder %s24, 1
      %p173 = por %p171, %p172
      %p174 = scmp.ne.s32.totalorder %s163, %s164
      %p175 = scmp.eq.s32.totalorder %s24, 0
      %p176 = por %p174, %p175
      %p177 = scmp.ne.s32.totalorder %s163, %s164
      %p178 = scmp.eq.s32.totalorder %s25, 1
      %p179 = por %p177, %p178
      %p181 = scmp.ne.s32.totalorder %s164, %s180
      %p182 = scmp.eq.s32.totalorder %s25, 0
      %p183 = por %p181, %p182
      %p184 = scmp.le.s32.totalorder 1, %s19
      %p185 = scmp.lt.s32.totalorder %s19, 3
      %p186 = pnand %p184, %p185
      %p187 = pneg %p186
      // Predicated region
      $region9: #{tpu_custom_call.1} parent=5 // pred_check
        _
      $region10: #{tpu_custom_call.1} parent=5 // pred_check_branch
        %189 = sbr.rel (%p186) target = $region12
      $region11: #{tpu_custom_call.1} parent=5 // pred_region
        %s190 = ssub.s32 %s19, 1
        // Predicated region
        $region13: #{tpu_custom_call.1} parent=11 // pred_check
          %p191 = pneg %p66
        $region14: #{tpu_custom_call.1} parent=11 // pred_check_branch
          %193 = sbr.rel (%p191) target = $region16
        $region15: #{tpu_custom_call.1} parent=11 // pred_region
          %s195 = ssub.s32 2048, 2048
          %196 = vsyncadd [#allocation6], %s195
          %s197 = sshll.u32 [#allocation5], 4
          %s198 = int_to_ptr.vmem [resolvable:$true] %s197
          %203 = dma.hbm_to_vmem [thread:$0]  %s1, 2048, %s198, [#allocation6], 128, 128, 8
        $region16: #{tpu_custom_call.1} parent=11 // pred_fallthru
          _
        // Predicated region
        $region17: #{tpu_custom_call.1} parent=11 // pred_check
          %p204 = pneg %p87
        $region18: #{tpu_custom_call.1} parent=11 // pred_check_branch
          %206 = sbr.rel (%p204) target = $region20
        $region19: #{tpu_custom_call.1} parent=11 // pred_region
          _
        $region20: #{tpu_custom_call.1} parent=11 // pred_fallthru
          _
        // Predicated region
        $region21: #{tpu_custom_call.1} parent=11 // pred_check
          %p207 = pneg %p108
        $region22: #{tpu_custom_call.1} parent=11 // pred_check_branch
          %209 = sbr.rel (%p207) target = $region24
        $region23: #{tpu_custom_call.1} parent=11 // pred_region
          %s211 = ssub.s32 2048, 2048
          %212 = vsyncadd [#allocation6], %s211
          %s213 = sshll.u32 [#allocation7], 4
          %s214 = int_to_ptr.vmem [resolvable:$true] %s213
          %219 = dma.hbm_to_vmem [thread:$0]  %s3, 2048, %s214, [#allocation6], 128, 128, 8
        $region24: #{tpu_custom_call.1} parent=11 // pred_fallthru
          _
        // Predicated region
        $region25: #{tpu_custom_call.1} parent=11 // pred_check
          %p220 = pneg %p129
        $region26: #{tpu_custom_call.1} parent=11 // pred_check_branch
          %222 = sbr.rel (%p220) target = $region28
        $region27: #{tpu_custom_call.1} parent=11 // pred_region
          _
        $region28: #{tpu_custom_call.1} parent=11 // pred_fallthru
          _
        // Predicated region
        $region29: #{tpu_custom_call.1} parent=11 // pred_check
          %p223 = pneg %p150
        $region30: #{tpu_custom_call.1} parent=11 // pred_check_branch
          %225 = sbr.rel (%p223) target = $region32
        $region31: #{tpu_custom_call.1} parent=11 // pred_region
          _
        $region32: #{tpu_custom_call.1} parent=11 // pred_fallthru
          _
      $region12: #{tpu_custom_call.1} parent=5 // pred_fallthru
        _
      %p226 = scmp.lt.s32.totalorder %s19, 2
      // Predicated region
      $region33: #{tpu_custom_call.1} parent=5 // pred_check
        %p227 = pneg %p226
      $region34: #{tpu_custom_call.1} parent=5 // pred_check_branch
        %229 = sbr.rel (%p227) target = $region36
      $region35: #{tpu_custom_call.1} parent=5 // pred_region
        // Predicated region
        $region37: #{tpu_custom_call.1} parent=35 // pred_check
          %p230 = pneg %p39
        $region38: #{tpu_custom_call.1} parent=35 // pred_check_branch
          %232 = sbr.rel (%p230) target = $region40
        $region39: #{tpu_custom_call.1} parent=35 // pred_region
          %s233 = sand.u32 %s29, 1
          %s234 = scalar_lea.sflag [#allocation3], %s233
          %s235 = sand.u32 %s29, 1
          %s236 = smul.addr %s235, 32
          %s237 = scalar_lea.vmem [#allocation2], %s236
          %s238 = smul.u32 2, %s19
          %s240 = ssub.s32 512, 512
          %241 = vsyncadd %s234, %s240
          %s242 = smul.addr %s238, 2
          %s243 = smul.addr %s242, 128
          %s244 = scalar_lea.hbm %s0, %s243
          %s245 = sshll.u32 %s237, 4
          %s246 = int_to_ptr.vmem [resolvable:$true] %s245
          %251 = dma.hbm_to_vmem [thread:$0]  %s244, 512, %s246, %s234, 128, 128, 8
        $region40: #{tpu_custom_call.1} parent=35 // pred_fallthru
          _
      $region36: #{tpu_custom_call.1} parent=5 // pred_fallthru
        _
      %p252 = scmp.le.s32.totalorder 1, %s19
      %p253 = scmp.lt.s32.totalorder %s19, 3
      %p254 = pnand %p252, %p253
      %p255 = pneg %p254
      // Predicated region
      $region41: #{tpu_custom_call.1} parent=5 // pred_check
        _
      $region42: #{tpu_custom_call.1} parent=5 // pred_check_branch
        %257 = sbr.rel (%p254) target = $region44
      $region43: #{tpu_custom_call.1} parent=5 // pred_region
        %s258 = ssub.s32 %s19, 1
        %s259 = sand.u32 %s32, 1
        %s260 = scalar_lea.sflag [#allocation3], %s259
        %s261 = sand.u32 %s32, 1
        %s262 = smul.addr %s261, 32
        %s263 = scalar_lea.vmem [#allocation2], %s262
        // Predicated region
        $region45: #{tpu_custom_call.1} parent=43 // pred_check
          %p264 = pneg %p45
        $region46: #{tpu_custom_call.1} parent=43 // pred_check_branch
          %266 = sbr.rel (%p264) target = $region48
        $region47: #{tpu_custom_call.1} parent=43 // pred_region
          %267 = dma.done %s260, 512
        $region48: #{tpu_custom_call.1} parent=43 // pred_fallthru
          _
        // Predicated region
        $region49: #{tpu_custom_call.1} parent=43 // pred_check
          %p268 = pneg %p66
        $region50: #{tpu_custom_call.1} parent=43 // pred_check_branch
          %270 = sbr.rel (%p268) target = $region52
        $region51: #{tpu_custom_call.1} parent=43 // pred_region
          %271 = dma.done [#allocation6], 2048
        $region52: #{tpu_custom_call.1} parent=43 // pred_fallthru
          _
        // Predicated region
        $region53: #{tpu_custom_call.1} parent=43 // pred_check
          %p272 = pneg %p108
        $region54: #{tpu_custom_call.1} parent=43 // pred_check_branch
          %274 = sbr.rel (%p272) target = $region56
        $region55: #{tpu_custom_call.1} parent=43 // pred_region
          %275 = dma.done [#allocation6], 2048
        $region56: #{tpu_custom_call.1} parent=43 // pred_fallthru
          _
        %s276 = sand.u32 %s32, 1
        %s277 = scalar_lea.sflag [#allocation3], %s276
        %s278 = sand.u32 %s32, 1
        %s279 = smul.addr %s278, 32
        %s280 = scalar_lea.vmem [#allocation2], %s279
        %p281 = pneg %p45
        %p282 = pneg %p42
        %p283 = pneg %p66
        %p284 = pneg %p63
        %p285 = pneg %p87
        %p286 = pneg %p84
        %p287 = pneg %p108
        %p288 = pneg %p105
        %p289 = pneg %p129
        %p290 = pneg %p126
        %p291 = pneg %p150
        %p292 = pneg %p147
        %p293 = pneg %p176
        %p294 = pneg %p173
        %s295 = sand.u32 %s163, 1
        %s296 = scalar_lea.sflag [#allocation4], %s295
        %s297 = sand.u32 %s163, 1
        %s298 = smul.addr %s297, 8
        %s299 = scalar_lea.vmem [#allocation8], %s298
        %s300 = smul.u32 2, %s24
        %s301 = smul.u32 2, %s24
        %v302 = vld [vmem:[%s263] sm:$0xff]
        %v303 = vld [vmem:[%s263 + $0x8] sm:$0xff]
        %v304 = vld [vmem:[%s263 + $0x10] sm:$0xff]
        %v305 = vld [vmem:[%s263 + $0x18] sm:$0xff]
        %v306 = vld [vmem:[#allocation5] sm:$0xff]
        %v307 = vld [vmem:[#allocation5 + $0x8] sm:$0xff]
        %v308 = vld [vmem:[#allocation5 + $0x10] sm:$0xff]
        %v309 = vld [vmem:[#allocation5 + $0x18] sm:$0xff]
        %v310 = vld [vmem:[#allocation5 + $0x20] sm:$0xff]
        %v311 = vld [vmem:[#allocation5 + $0x28] sm:$0xff]
        %v312 = vld [vmem:[#allocation5 + $0x30] sm:$0xff]
        %v313 = vld [vmem:[#allocation5 + $0x38] sm:$0xff]
        %v314 = vld [vmem:[#allocation5 + $0x40] sm:$0xff]
        %v315 = vld [vmem:[#allocation5 + $0x48] sm:$0xff]
        %v316 = vld [vmem:[#allocation5 + $0x50] sm:$0xff]
        %v317 = vld [vmem:[#allocation5 + $0x58] sm:$0xff]
        %v318 = vld [vmem:[#allocation5 + $0x60] sm:$0xff]
        %v319 = vld [vmem:[#allocation5 + $0x68] sm:$0xff]
        %v320 = vld [vmem:[#allocation5 + $0x70] sm:$0xff]
        %v321 = vld [vmem:[#allocation5 + $0x78] sm:$0xff]
        %v322 = vld [vmem:[%s2] sm:$0x1]
        %v324 = vlaneseq
        %v325 = vshrl.u32 %v324, 7
        %v326 = vsub.s32 0, %v325
        %v327 = vrot.slane %v322, %v326
        %329 = vmatprep.subr.mxu0 0.0
        %330 = vmatpush1.msra.mxu0 %v306
        %331 = vmatprep.subr.mxu0 0.0
        %332 = vmatpush1.msra.mxu0 %v307
        %333 = vmatprep.subr.mxu0 0.0
        %334 = vmatpush1.msra.mxu0 %v308
        %335 = vmatprep.subr.mxu0 0.0
        %336 = vmatpush1.msra.mxu0 %v309
        %337 = vmatprep.subr.mxu0 0.0
        %338 = vmatpush1.msra.mxu0 %v310
        %339 = vmatprep.subr.mxu0 0.0
        %340 = vmatpush1.msra.mxu0 %v311
        %341 = vmatprep.subr.mxu0 0.0
        %342 = vmatpush1.msra.mxu0 %v312
        %343 = vmatprep.subr.mxu0 0.0
        %344 = vmatpush1.msra.mxu0 %v313
        %345 = vmatprep.subr.mxu0 0.0
        %346 = vmatpush1.msra.mxu0 %v314
        %347 = vmatprep.subr.mxu0 0.0
        %348 = vmatpush1.msra.mxu0 %v315
        %349 = vmatprep.subr.mxu0 0.0
        %350 = vmatpush1.msra.mxu0 %v316
        %351 = vmatprep.subr.mxu0 0.0
        %352 = vmatpush1.msra.mxu0 %v317
        %353 = vmatprep.subr.mxu0 0.0
        %354 = vmatpush1.msra.mxu0 %v318
        %355 = vmatprep.subr.mxu0 0.0
        %356 = vmatpush1.msra.mxu0 %v319
        %357 = vmatprep.subr.mxu0 0.0
        %358 = vmatpush1.msra.mxu0 %v320
        %359 = vmatprep.subr.mxu0 0.0
        %360 = vmatpush1.msra.mxu0 %v321
        %361 = vmatprep.subr.mxu0 0.0
        %362 = vmatpush1.msra.mxu0 0.0
        %363 = vmatprep.subr.mxu0 0.0
        %364 = vmatpush1.msra.mxu0 0.0
        %365 = vmatprep.subr.mxu0 0.0
        %366 = vmatpush1.msra.mxu0 0.0
        %367 = vmatprep.subr.mxu0 0.0
        %368 = vmatpush1.msra.mxu0 0.0
        %369 = vmatprep.subr.mxu0 0.0
        %370 = vmatpush1.msra.mxu0 0.0
        %371 = vmatprep.subr.mxu0 0.0
        %372 = vmatpush1.msra.mxu0 0.0
        %373 = vmatprep.subr.mxu0 0.0
        %374 = vmatpush1.msra.mxu0 0.0
        %375 = vmatprep.subr.mxu0 0.0
        %376 = vmatpush1.msra.mxu0 0.0
        %377 = vmatprep.subr.mxu0 0.0
        %378 = vmatpush1.msra.mxu0 0.0
        %379 = vmatprep.subr.mxu0 0.0
        %380 = vmatpush1.msra.mxu0 0.0
        %381 = vmatprep.subr.mxu0 0.0
        %382 = vmatpush1.msra.mxu0 0.0
        %383 = vmatprep.subr.mxu0 0.0
        %384 = vmatpush1.msra.mxu0 0.0
        %385 = vmatprep.subr.mxu0 0.0
        %386 = vmatpush1.msra.mxu0 0.0
        %387 = vmatprep.subr.mxu0 0.0
        %388 = vmatpush1.msra.mxu0 0.0
        %389 = vmatprep.subr.mxu0 0.0
        %390 = vmatpush1.msra.mxu0 0.0
        %391 = vmatprep.subr.mxu0 0.0
        %392 = vmatpush1.msra.mxu0 0.0
        %393 = vmatprep.mubr.f32.mxu0 0.0
        %394 = vmatmul.mubr.f32.gmra.mrb[0].mxu0 %v302
        %v395 = vpop.f32.mrb[0].mxu0
        %v396 = vadd.f32 %v327, %v395
        %v397 = vpop.f32.mrb[0].mxu0
        %398 = vmatprep.mubr.f32.mxu0 0.0
        %399 = vmatmul.mubr.f32.gmra.mrb[0].mxu0 %v303
        %v400 = vpop.f32.mrb[0].mxu0
        %v401 = vadd.f32 %v327, %v400
        %v402 = vpop.f32.mrb[0].mxu0
        %403 = vmatprep.mubr.f32.mxu0 0.0
        %404 = vmatmul.mubr.f32.gmra.mrb[0].mxu0 %v304
        %v405 = vpop.f32.mrb[0].mxu0
        %v406 = vadd.f32 %v327, %v405
        %v407 = vpop.f32.mrb[0].mxu0
        %408 = vmatprep.mubr.f32.mxu0 0.0
        %409 = vmatmul.mubr.f32.gmra.mrb[0].mxu0 %v305
        %v410 = vpop.f32.mrb[0].mxu0
        %v411 = vadd.f32 %v327, %v410
        %v412 = vpop.f32.mrb[0].mxu0
        %413 = vdwg.mxu0
        %v414 = vld [vmem:[#allocation7] sm:$0xff]
        %v415 = vld [vmem:[#allocation7 + $0x8] sm:$0xff]
        %v416 = vld [vmem:[#allocation7 + $0x10] sm:$0xff]
        %v417 = vld [vmem:[#allocation7 + $0x18] sm:$0xff]
        %v418 = vld [vmem:[#allocation7 + $0x20] sm:$0xff]
        %v419 = vld [vmem:[#allocation7 + $0x28] sm:$0xff]
        %v420 = vld [vmem:[#allocation7 + $0x30] sm:$0xff]
        %v421 = vld [vmem:[#allocation7 + $0x38] sm:$0xff]
        %v422 = vld [vmem:[#allocation7 + $0x40] sm:$0xff]
        %v423 = vld [vmem:[#allocation7 + $0x48] sm:$0xff]
        %v424 = vld [vmem:[#allocation7 + $0x50] sm:$0xff]
        %v425 = vld [vmem:[#allocation7 + $0x58] sm:$0xff]
        %v426 = vld [vmem:[#allocation7 + $0x60] sm:$0xff]
        %v427 = vld [vmem:[#allocation7 + $0x68] sm:$0xff]
        %v428 = vld [vmem:[#allocation7 + $0x70] sm:$0xff]
        %v429 = vld [vmem:[#allocation7 + $0x78] sm:$0xff]
        %v430 = vld [vmem:[%s4] sm:$0x1]
        %v432 = vlaneseq
        %v433 = vshrl.u32 %v432, 7
        %v434 = vsub.s32 0, %v433
        %v435 = vrot.slane %v430, %v434
        %437 = vmatprep.subr.mxu0 0.0
        %438 = vmatpush1.msra.mxu0 %v414
        %439 = vmatprep.subr.mxu0 0.0
        %440 = vmatpush1.msra.mxu0 %v415
        %441 = vmatprep.subr.mxu0 0.0
        %442 = vmatpush1.msra.mxu0 %v416
        %443 = vmatprep.subr.mxu0 0.0
        %444 = vmatpush1.msra.mxu0 %v417
        %445 = vmatprep.subr.mxu0 0.0
        %446 = vmatpush1.msra.mxu0 %v418
        %447 = vmatprep.subr.mxu0 0.0
        %448 = vmatpush1.msra.mxu0 %v419
        %449 = vmatprep.subr.mxu0 0.0
        %450 = vmatpush1.msra.mxu0 %v420
        %451 = vmatprep.subr.mxu0 0.0
        %452 = vmatpush1.msra.mxu0 %v421
        %453 = vmatprep.subr.mxu0 0.0
        %454 = vmatpush1.msra.mxu0 %v422
        %455 = vmatprep.subr.mxu0 0.0
        %456 = vmatpush1.msra.mxu0 %v423
        %457 = vmatprep.subr.mxu0 0.0
        %458 = vmatpush1.msra.mxu0 %v424
        %459 = vmatprep.subr.mxu0 0.0
        %460 = vmatpush1.msra.mxu0 %v425
        %461 = vmatprep.subr.mxu0 0.0
        %462 = vmatpush1.msra.mxu0 %v426
        %463 = vmatprep.subr.mxu0 0.0
        %464 = vmatpush1.msra.mxu0 %v427
        %465 = vmatprep.subr.mxu0 0.0
        %466 = vmatpush1.msra.mxu0 %v428
        %467 = vmatprep.subr.mxu0 0.0
        %468 = vmatpush1.msra.mxu0 %v429
        %469 = vmatprep.subr.mxu0 0.0
        %470 = vmatpush1.msra.mxu0 0.0
        %471 = vmatprep.subr.mxu0 0.0
        %472 = vmatpush1.msra.mxu0 0.0
        %473 = vmatprep.subr.mxu0 0.0
        %474 = vmatpush1.msra.mxu0 0.0
        %475 = vmatprep.subr.mxu0 0.0
        %476 = vmatpush1.msra.mxu0 0.0
        %477 = vmatprep.subr.mxu0 0.0
        %478 = vmatpush1.msra.mxu0 0.0
        %479 = vmatprep.subr.mxu0 0.0
        %480 = vmatpush1.msra.mxu0 0.0
        %481 = vmatprep.subr.mxu0 0.0
        %482 = vmatpush1.msra.mxu0 0.0
        %483 = vmatprep.subr.mxu0 0.0
        %484 = vmatpush1.msra.mxu0 0.0
        %485 = vmatprep.subr.mxu0 0.0
        %486 = vmatpush1.msra.mxu0 0.0
        %487 = vmatprep.subr.mxu0 0.0
        %488 = vmatpush1.msra.mxu0 0.0
        %489 = vmatprep.subr.mxu0 0.0
        %490 = vmatpush1.msra.mxu0 0.0
        %491 = vmatprep.subr.mxu0 0.0
        %492 = vmatpush1.msra.mxu0 0.0
        %493 = vmatprep.subr.mxu0 0.0
        %494 = vmatpush1.msra.mxu0 0.0
        %495 = vmatprep.subr.mxu0 0.0
        %496 = vmatpush1.msra.mxu0 0.0
        %497 = vmatprep.subr.mxu0 0.0
        %498 = vmatpush1.msra.mxu0 0.0
        %499 = vmatprep.subr.mxu0 0.0
        %500 = vmatpush1.msra.mxu0 0.0
        %501 = vmatprep.mubr.f32.mxu0 0.0
        %502 = vmatmul.mubr.f32.gmra.mrb[0].mxu0 %v302
        %v503 = vpop.f32.mrb[0].mxu0
        %v504 = vadd.f32 %v435, %v503
        %v505 = vpop.f32.mrb[0].mxu0
        %506 = vmatprep.mubr.f32.mxu0 0.0
        %507 = vmatmul.mubr.f32.gmra.mrb[0].mxu0 %v303
        %v508 = vpop.f32.mrb[0].mxu0
        %v509 = vadd.f32 %v435, %v508
        %v510 = vpop.f32.mrb[0].mxu0
        %511 = vmatprep.mubr.f32.mxu0 0.0
        %512 = vmatmul.mubr.f32.gmra.mrb[0].mxu0 %v304
        %v513 = vpop.f32.mrb[0].mxu0
        %v514 = vadd.f32 %v435, %v513
        %v515 = vpop.f32.mrb[0].mxu0
        %516 = vmatprep.mubr.f32.mxu0 0.0
        %517 = vmatmul.mubr.f32.gmra.mrb[0].mxu0 %v305
        %v518 = vpop.f32.mrb[0].mxu0
        %v519 = vadd.f32 %v435, %v518
        %v520 = vpop.f32.mrb[0].mxu0
        %521 = vdwg.mxu0
        %v522 = vld [vmem:[%s5] sm:$0xf]
        %523 = vmatprep.subr.mxu0 0.0
        %524 = vmatpush1.xpose.msra.mxu0 %v396
        %525 = vmatprep.subr.mxu0 0.0
        %526 = vmatpush1.xpose.msra.mxu0 %v401
        %527 = vmatprep.subr.mxu0 0.0
        %528 = vmatpush1.xpose.msra.mxu0 0.0
        %529 = vmatprep.subr.mxu0 0.0
        %530 = vmatpush1.xpose.msra.mxu0 0.0
        %531 = vmatprep.subr.mxu0 0.0
        %532 = vmatpush1.xpose.msra.mxu0 0.0
        %533 = vmatprep.subr.mxu0 0.0
        %534 = vmatpush1.xpose.msra.mxu0 0.0
        %535 = vmatprep.subr.mxu0 0.0
        %536 = vmatpush1.xpose.msra.mxu0 0.0
        %537 = vmatprep.subr.mxu0 0.0
        %538 = vmatpush1.xpose.msra.mxu0 0.0
        %539 = vmatprep.subr.mxu0 0.0
        %540 = vmatpush1.xpose.msra.mxu0 0.0
        %541 = vmatprep.subr.mxu0 0.0
        %542 = vmatpush1.xpose.msra.mxu0 0.0
        %543 = vmatprep.subr.mxu0 0.0
        %544 = vmatpush1.xpose.msra.mxu0 0.0
        %545 = vmatprep.subr.mxu0 0.0
        %546 = vmatpush1.xpose.msra.mxu0 0.0
        %547 = vmatprep.subr.mxu0 0.0
        %548 = vmatpush1.xpose.msra.mxu0 0.0
        %549 = vmatprep.subr.mxu0 0.0
        %550 = vmatpush1.xpose.msra.mxu0 0.0
        %551 = vmatprep.subr.mxu0 0.0
        %552 = vmatpush1.xpose.msra.mxu0 0.0
        %553 = vmatprep.subr.mxu0 0.0
        %554 = vmatpush1.xpose.msra.mxu0 0.0
        %555 = vmatprep.subr.mxu0 0.0
        %556 = vmatpush1.xpose.msra.mxu0 0.0
        %557 = vmatprep.subr.mxu0 0.0
        %558 = vmatpush1.xpose.msra.mxu0 0.0
        %559 = vmatprep.subr.mxu0 0.0
        %560 = vmatpush1.xpose.msra.mxu0 0.0
        %561 = vmatprep.subr.mxu0 0.0
        %562 = vmatpush1.xpose.msra.mxu0 0.0
        %563 = vmatprep.subr.mxu0 0.0
        %564 = vmatpush1.xpose.msra.mxu0 0.0
        %565 = vmatprep.subr.mxu0 0.0
        %566 = vmatpush1.xpose.msra.mxu0 0.0
        %567 = vmatprep.subr.mxu0 0.0
        %568 = vmatpush1.xpose.msra.mxu0 0.0
        %569 = vmatprep.subr.mxu0 0.0
        %570 = vmatpush1.xpose.msra.mxu0 0.0
        %571 = vmatprep.subr.mxu0 0.0
        %572 = vmatpush1.xpose.msra.mxu0 0.0
        %573 = vmatprep.subr.mxu0 0.0
        %574 = vmatpush1.xpose.msra.mxu0 0.0
        %575 = vmatprep.subr.mxu0 0.0
        %576 = vmatpush1.xpose.msra.mxu0 0.0
        %577 = vmatprep.subr.mxu0 0.0
        %578 = vmatpush1.xpose.msra.mxu0 0.0
        %579 = vmatprep.subr.mxu0 0.0
        %580 = vmatpush1.xpose.msra.mxu0 0.0
        %581 = vmatprep.subr.mxu0 0.0
        %582 = vmatpush1.xpose.msra.mxu0 0.0
        %583 = vmatprep.subr.mxu0 0.0
        %584 = vmatpush1.xpose.msra.mxu0 0.0
        %585 = vmatprep.subr.mxu0 0.0
        %586 = vmatpush1.xpose.msra.mxu0 0.0
        %587 = vmatprep.mubr.f32.mxu0 0.0
        %588 = vmatmul.mubr.f32.gmra.mrb[0].mxu0 %v522
        %v589 = vpop.f32.mrb[0].mxu0
        %v590 = vadd.f32 0.0, %v589
        %v591 = vpop.f32.mrb[0].mxu0
        %592 = vdwg.mxu0
        %593 = vmatprep.subr.mxu0 0.0
        %594 = vmatpush1.xpose.msra.mxu0 %v406
        %595 = vmatprep.subr.mxu0 0.0
        %596 = vmatpush1.xpose.msra.mxu0 %v411
        %597 = vmatprep.subr.mxu0 0.0
        %598 = vmatpush1.xpose.msra.mxu0 0.0
        %599 = vmatprep.subr.mxu0 0.0
        %600 = vmatpush1.xpose.msra.mxu0 0.0
        %601 = vmatprep.subr.mxu0 0.0
        %602 = vmatpush1.xpose.msra.mxu0 0.0
        %603 = vmatprep.subr.mxu0 0.0
        %604 = vmatpush1.xpose.msra.mxu0 0.0
        %605 = vmatprep.subr.mxu0 0.0
        %606 = vmatpush1.xpose.msra.mxu0 0.0
        %607 = vmatprep.subr.mxu0 0.0
        %608 = vmatpush1.xpose.msra.mxu0 0.0
        %609 = vmatprep.subr.mxu0 0.0
        %610 = vmatpush1.xpose.msra.mxu0 0.0
        %611 = vmatprep.subr.mxu0 0.0
        %612 = vmatpush1.xpose.msra.mxu0 0.0
        %613 = vmatprep.subr.mxu0 0.0
        %614 = vmatpush1.xpose.msra.mxu0 0.0
        %615 = vmatprep.subr.mxu0 0.0
        %616 = vmatpush1.xpose.msra.mxu0 0.0
        %617 = vmatprep.subr.mxu0 0.0
        %618 = vmatpush1.xpose.msra.mxu0 0.0
        %619 = vmatprep.subr.mxu0 0.0
        %620 = vmatpush1.xpose.msra.mxu0 0.0
        %621 = vmatprep.subr.mxu0 0.0
        %622 = vmatpush1.xpose.msra.mxu0 0.0
        %623 = vmatprep.subr.mxu0 0.0
        %624 = vmatpush1.xpose.msra.mxu0 0.0
        %625 = vmatprep.subr.mxu0 0.0
        %626 = vmatpush1.xpose.msra.mxu0 0.0
        %627 = vmatprep.subr.mxu0 0.0
        %628 = vmatpush1.xpose.msra.mxu0 0.0
        %629 = vmatprep.subr.mxu0 0.0
        %630 = vmatpush1.xpose.msra.mxu0 0.0
        %631 = vmatprep.subr.mxu0 0.0
        %632 = vmatpush1.xpose.msra.mxu0 0.0
        %633 = vmatprep.subr.mxu0 0.0
        %634 = vmatpush1.xpose.msra.mxu0 0.0
        %635 = vmatprep.subr.mxu0 0.0
        %636 = vmatpush1.xpose.msra.mxu0 0.0
        %637 = vmatprep.subr.mxu0 0.0
        %638 = vmatpush1.xpose.msra.mxu0 0.0
        %639 = vmatprep.subr.mxu0 0.0
        %640 = vmatpush1.xpose.msra.mxu0 0.0
        %641 = vmatprep.subr.mxu0 0.0
        %642 = vmatpush1.xpose.msra.mxu0 0.0
        %643 = vmatprep.subr.mxu0 0.0
        %644 = vmatpush1.xpose.msra.mxu0 0.0
        %645 = vmatprep.subr.mxu0 0.0
        %646 = vmatpush1.xpose.msra.mxu0 0.0
        %647 = vmatprep.subr.mxu0 0.0
        %648 = vmatpush1.xpose.msra.mxu0 0.0
        %649 = vmatprep.subr.mxu0 0.0
        %650 = vmatpush1.xpose.msra.mxu0 0.0
        %651 = vmatprep.subr.mxu0 0.0
        %652 = vmatpush1.xpose.msra.mxu0 0.0
        %653 = vmatprep.subr.mxu0 0.0
        %654 = vmatpush1.xpose.msra.mxu0 0.0
        %655 = vmatprep.subr.mxu0 0.0
        %656 = vmatpush1.xpose.msra.mxu0 0.0
        %657 = vmatprep.mubr.f32.mxu0 0.0
        %658 = vmatmul.mubr.f32.gmra.mrb[0].mxu0 %v522
        %v659 = vpop.f32.mrb[0].mxu0
        %v660 = vadd.f32 0.0, %v659
        %v661 = vpop.f32.mrb[0].mxu0
        %662 = vdwg.mxu0
        %v663 = vmul.f32 %v590, 0.12403473
        %v664 = vmul.f32 %v660, 0.12403473
        %vm665 = vcmask 125952
        %v666 = vsel %vm665, %v663, -inf
        %667 = vmax.xlane.f32.xlu0 %v666
        %v668 = vpop.xlane.xlu0 %667
        %v669 = vsel %vm665, %v664, -inf
        %670 = vmax.xlane.f32.xlu0 %v669
        %v671 = vpop.xlane.xlu0 %670
        %v672 = vsub.f32 %v663, %v668
        %v673 = vsub.f32 %v664, %v671
        %v674 = vmul.f32 %v672, 1.442695
        %v675 = vpow.pop %v674
        %v676 = vmul.f32 %v673, 1.442695
        %v677 = vpow.pop %v676
        %v678 = vsel %vm665, %v675, 0.0
        %679 = vadd.xlane.f32.xlu0 %v678
        %v680 = vpop.xlane.xlu0 %679
        %v681 = vsel %vm665, %v677, 0.0
        %682 = vadd.xlane.f32.xlu0 %v681
        %v683 = vpop.xlane.xlu0 %682
        %v684 = vrcp.pop %v680
        %v685 = vrcp.pop %v683
        %v686 = vmul.f32 %v675, %v684
        %v687 = vmul.f32 %v677, %v685
        %vm688 = vcmask 130048
        %v690 = vsel %vm688, %v686, 0
        %692 = vmatprep.subr.mxu0 0.0
        %693 = vmatpush1.msra.mxu0 %v504
        %694 = vmatprep.subr.mxu0 0.0
        %695 = vmatpush1.msra.mxu0 %v509
        %696 = vmatprep.subr.mxu0 0.0
        %697 = vmatpush1.msra.mxu0 0.0
        %698 = vmatprep.subr.mxu0 0.0
        %699 = vmatpush1.msra.mxu0 0.0
        %700 = vmatprep.subr.mxu0 0.0
        %701 = vmatpush1.msra.mxu0 0.0
        %702 = vmatprep.subr.mxu0 0.0
        %703 = vmatpush1.msra.mxu0 0.0
        %704 = vmatprep.subr.mxu0 0.0
        %705 = vmatpush1.msra.mxu0 0.0
        %706 = vmatprep.subr.mxu0 0.0
        %707 = vmatpush1.msra.mxu0 0.0
        %708 = vmatprep.subr.mxu0 0.0
        %709 = vmatpush1.msra.mxu0 0.0
        %710 = vmatprep.subr.mxu0 0.0
        %711 = vmatpush1.msra.mxu0 0.0
        %712 = vmatprep.subr.mxu0 0.0
        %713 = vmatpush1.msra.mxu0 0.0
        %714 = vmatprep.subr.mxu0 0.0
        %715 = vmatpush1.msra.mxu0 0.0
        %716 = vmatprep.subr.mxu0 0.0
        %717 = vmatpush1.msra.mxu0 0.0
        %718 = vmatprep.subr.mxu0 0.0
        %719 = vmatpush1.msra.mxu0 0.0
        %720 = vmatprep.subr.mxu0 0.0
        %721 = vmatpush1.msra.mxu0 0.0
        %722 = vmatprep.subr.mxu0 0.0
        %723 = vmatpush1.msra.mxu0 0.0
        %724 = vmatprep.subr.mxu0 0.0
        %725 = vmatpush1.msra.mxu0 0.0
        %726 = vmatprep.subr.mxu0 0.0
        %727 = vmatpush1.msra.mxu0 0.0
        %728 = vmatprep.subr.mxu0 0.0
        %729 = vmatpush1.msra.mxu0 0.0
        %730 = vmatprep.subr.mxu0 0.0
        %731 = vmatpush1.msra.mxu0 0.0
        %732 = vmatprep.subr.mxu0 0.0
        %733 = vmatpush1.msra.mxu0 0.0
        %734 = vmatprep.subr.mxu0 0.0
        %735 = vmatpush1.msra.mxu0 0.0
        %736 = vmatprep.subr.mxu0 0.0
        %737 = vmatpush1.msra.mxu0 0.0
        %738 = vmatprep.subr.mxu0 0.0
        %739 = vmatpush1.msra.mxu0 0.0
        %740 = vmatprep.subr.mxu0 0.0
        %741 = vmatpush1.msra.mxu0 0.0
        %742 = vmatprep.subr.mxu0 0.0
        %743 = vmatpush1.msra.mxu0 0.0
        %744 = vmatprep.subr.mxu0 0.0
        %745 = vmatpush1.msra.mxu0 0.0
        %746 = vmatprep.subr.mxu0 0.0
        %747 = vmatpush1.msra.mxu0 0.0
        %748 = vmatprep.subr.mxu0 0.0
        %749 = vmatpush1.msra.mxu0 0.0
        %750 = vmatprep.subr.mxu0 0.0
        %751 = vmatpush1.msra.mxu0 0.0
        %752 = vmatprep.subr.mxu0 0.0
        %753 = vmatpush1.msra.mxu0 0.0
        %754 = vmatprep.subr.mxu0 0.0
        %755 = vmatpush1.msra.mxu0 0.0
        %756 = vmatprep.mubr.f32.mxu0 0.0
        %757 = vmatmul.mubr.f32.gmra.mrb[0].mxu0 %v690
        %v758 = vpop.f32.mrb[0].mxu0
        %v759 = vadd.f32 0.0, %v758
        %v760 = vpop.f32.mrb[0].mxu0
        %761 = vdwg.mxu0
        %v763 = vsel %vm688, %v687, 0
        %765 = vmatprep.subr.mxu0 0.0
        %766 = vmatpush1.msra.mxu0 %v514
        %767 = vmatprep.subr.mxu0 0.0
        %768 = vmatpush1.msra.mxu0 %v519
        %769 = vmatprep.subr.mxu0 0.0
        %770 = vmatpush1.msra.mxu0 0.0
        %771 = vmatprep.subr.mxu0 0.0
        %772 = vmatpush1.msra.mxu0 0.0
        %773 = vmatprep.subr.mxu0 0.0
        %774 = vmatpush1.msra.mxu0 0.0
        %775 = vmatprep.subr.mxu0 0.0
        %776 = vmatpush1.msra.mxu0 0.0
        %777 = vmatprep.subr.mxu0 0.0
        %778 = vmatpush1.msra.mxu0 0.0
        %779 = vmatprep.subr.mxu0 0.0
        %780 = vmatpush1.msra.mxu0 0.0
        %781 = vmatprep.subr.mxu0 0.0
        %782 = vmatpush1.msra.mxu0 0.0
        %783 = vmatprep.subr.mxu0 0.0
        %784 = vmatpush1.msra.mxu0 0.0
        %785 = vmatprep.subr.mxu0 0.0
        %786 = vmatpush1.msra.mxu0 0.0
        %787 = vmatprep.subr.mxu0 0.0
        %788 = vmatpush1.msra.mxu0 0.0
        %789 = vmatprep.subr.mxu0 0.0
        %790 = vmatpush1.msra.mxu0 0.0
        %791 = vmatprep.subr.mxu0 0.0
        %792 = vmatpush1.msra.mxu0 0.0
        %793 = vmatprep.subr.mxu0 0.0
        %794 = vmatpush1.msra.mxu0 0.0
        %795 = vmatprep.subr.mxu0 0.0
        %796 = vmatpush1.msra.mxu0 0.0
        %797 = vmatprep.subr.mxu0 0.0
        %798 = vmatpush1.msra.mxu0 0.0
        %799 = vmatprep.subr.mxu0 0.0
        %800 = vmatpush1.msra.mxu0 0.0
        %801 = vmatprep.subr.mxu0 0.0
        %802 = vmatpush1.msra.mxu0 0.0
        %803 = vmatprep.subr.mxu0 0.0
        %804 = vmatpush1.msra.mxu0 0.0
        %805 = vmatprep.subr.mxu0 0.0
        %806 = vmatpush1.msra.mxu0 0.0
        %807 = vmatprep.subr.mxu0 0.0
        %808 = vmatpush1.msra.mxu0 0.0
        %809 = vmatprep.subr.mxu0 0.0
        %810 = vmatpush1.msra.mxu0 0.0
        %811 = vmatprep.subr.mxu0 0.0
        %812 = vmatpush1.msra.mxu0 0.0
        %813 = vmatprep.subr.mxu0 0.0
        %814 = vmatpush1.msra.mxu0 0.0
        %815 = vmatprep.subr.mxu0 0.0
        %816 = vmatpush1.msra.mxu0 0.0
        %817 = vmatprep.subr.mxu0 0.0
        %818 = vmatpush1.msra.mxu0 0.0
        %819 = vmatprep.subr.mxu0 0.0
        %820 = vmatpush1.msra.mxu0 0.0
        %821 = vmatprep.subr.mxu0 0.0
        %822 = vmatpush1.msra.mxu0 0.0
        %823 = vmatprep.subr.mxu0 0.0
        %824 = vmatpush1.msra.mxu0 0.0
        %825 = vmatprep.subr.mxu0 0.0
        %826 = vmatpush1.msra.mxu0 0.0
        %827 = vmatprep.subr.mxu0 0.0
        %828 = vmatpush1.msra.mxu0 0.0
        %829 = vmatprep.mubr.f32.mxu0 0.0
        %830 = vmatmul.mubr.f32.gmra.mrb[0].mxu0 %v763
        %v831 = vpop.f32.mrb[0].mxu0
        %v832 = vadd.f32 0.0, %v831
        %v833 = vpop.f32.mrb[0].mxu0
        %834 = vdwg.mxu0
        %835 = vst [vmem:[%s299] sm:$0xf] %v759
        %836 = vst [vmem:[%s299 + $0x4] sm:$0xf] %v832
        %s837 = sand.u32 %s163, 1
        %s838 = scalar_lea.sflag [#allocation4], %s837
        %s839 = sand.u32 %s163, 1
        %s840 = smul.addr %s839, 8
        %s841 = scalar_lea.vmem [#allocation8], %s840
        // Predicated region
        $region57: #{tpu_custom_call.1} parent=43 // pred_check
          %p842 = pneg %p173
        $region58: #{tpu_custom_call.1} parent=43 // pred_check_branch
          %844 = sbr.rel (%p842) target = $region60
        $region59: #{tpu_custom_call.1} parent=43 // pred_region
          %s845 = smul.u32 2, %s24
          %s847 = ssub.s32 128, 128
          %848 = vsyncadd %s838, %s847
          %s849 = smul.addr %s845, 64
          %s850 = scalar_lea.hbm %s6, %s849
          %s851 = sshll.u32 %s841, 4
          %s852 = int_to_ptr.vmem [resolvable:$true] %s851
          %857 = dma.vmem_to_hbm [thread:$0]  %s852, 128, %s850, %s838, 64, 64, 4
        $region60: #{tpu_custom_call.1} parent=43 // pred_fallthru
          _
      $region44: #{tpu_custom_call.1} parent=5 // pred_fallthru
        _
      %p858 = scmp.le.s32.totalorder 2, %s19
      // Predicated region
      $region61: #{tpu_custom_call.1} parent=5 // pred_check
        %p859 = pneg %p858
      $region62: #{tpu_custom_call.1} parent=5 // pred_check_branch
        %861 = sbr.rel (%p859) target = $region64
      $region63: #{tpu_custom_call.1} parent=5 // pred_region
        %s862 = ssub.s32 %s19, 2
        // Predicated region
        $region65: #{tpu_custom_call.1} parent=63 // pred_check
          %p863 = pneg %p179
        $region66: #{tpu_custom_call.1} parent=63 // pred_check_branch
          %865 = sbr.rel (%p863) target = $region68
        $region67: #{tpu_custom_call.1} parent=63 // pred_region
          %s866 = sand.u32 %s164, 1
          %s867 = scalar_lea.sflag [#allocation4], %s866
          %s868 = sand.u32 %s164, 1
          %s869 = smul.addr %s868, 8
          %s870 = scalar_lea.vmem [#allocation8], %s869
          %871 = dma.done %s867, 128
        $region68: #{tpu_custom_call.1} parent=63 // pred_fallthru
          _
      $region64: #{tpu_custom_call.1} parent=5 // pred_fallthru
        _
    $region6: #{tpu_custom_call.1} parent=1 // loop_footer
      %s23 = sadd.s32 1, %s19
    $region7: #{tpu_custom_call.1} parent=1 // loop_footer_branch
      %18 = sbr.rel target = $region3
    $region8: #{tpu_custom_call.1} parent=1 // loop_exit
      _
    %872 = vsyncpa [#allocation3], 1
    %s873 = scalar_lea.sflag [#allocation3], 1
    %874 = vsyncpa %s873, 1
    %875 = vsyncpa [#allocation6], 1
    %876 = vsyncpa [#allocation4], 1
    %s877 = scalar_lea.sflag [#allocation4], 1
    %878 = vsyncpa %s877, 1

</llo_original>
